<compile_context>
chip_gen: v5e
topology: v5e:2x2
jax: 0.10.0
libtpu: 0.0.40
codegen_flags: <defaults>
</compile_context>

<pallas_src>
import functools

import jax
import jax.numpy as jnp
from jax.experimental import pallas as pl
from jax.experimental.pallas import tpu as pltpu


def _mha_kernel(x_ref, wqkv_ref, wo_ref, o_ref, *, H, D):
    """x_ref:(S,E)  wqkv_ref:(E,NP)  wo_ref:(H*D,DP)  o_ref:(S,DP).

    Packed-weight column layout (built by pack_mha_weights):
      [ Q head0..H-1 | K head0..H-1 | V head0..H-1 | zero pad ]  (D cols each;
      the 1/sqrt(D) score scale is pre-folded into the Q columns).
    """
    x = x_ref[...]                                            # (S, E) f32
    HD = H * D

    # One fused projection for Q, K, V of all heads: (S,E) @ (E,NP).
    qkv = jnp.dot(x, wqkv_ref[...], preferred_element_type=jnp.float32)

    acc = jnp.zeros(o_ref.shape, jnp.float32)                 # (S, DP)
    for h in range(H):                    # static unroll, single invocation
        q = qkv[:, h * D:(h + 1) * D]                         # (S, D), pre-scaled
        k = qkv[:, HD + h * D:HD + (h + 1) * D]               # (S, D)
        v = qkv[:, 2 * HD + h * D:2 * HD + (h + 1) * D]       # (S, D)

        # scores = q @ k^T without materializing a transpose of K.
        s = jax.lax.dot_general(
            q, k, (((1,), (1,)), ((), ())),
            preferred_element_type=jnp.float32)               # (S, S)

        # Numerically-stable softmax with deferred (exact) normalization.
        m = jnp.max(s, axis=-1, keepdims=True)
        p = jnp.exp(s - m)                                    # unnormalized
        l = jnp.sum(p, axis=-1, keepdims=True)                # (S, 1)

        o_h = jnp.dot(p, v, preferred_element_type=jnp.float32)   # (S, D)
        o_h = o_h * pl.reciprocal(l, approx=False)            # exact 1/l

        # concat(heads) @ W_o  ==  sum_h head_h @ W_o[h*D:(h+1)*D, :]
        # -> accumulate on the MXU instead of a lane-wise concat.
        acc = acc + jnp.dot(o_h, wo_ref[h * D:(h + 1) * D, :],
                            preferred_element_type=jnp.float32)   # (S, DP)

    o_ref[...] = acc                                          # lane-dense store


def pack_mha_weights(wq, wk, wv, wo):
    """One-time weight repack (hoisted out of the per-call path).

    wq/wk/wv:(H,E,D), wo:(H*D,D)  ->  w_qkv_p:(E,NP), wo_p:(H*D,DP).
    """
    H, E, D = wq.shape
    HD = H * D

    # Fold the 1/sqrt(D) score scale into the Q columns (constant fold).
    scale = 1.0 / (float(D) ** 0.5)
    wq_s = wq.astype(jnp.float32) * scale

    # Column layout: [Q head0..H-1 | K head0..H-1 | V head0..H-1], D cols each.
    w_qkv = jnp.concatenate(
        [jnp.transpose(w, (1, 0, 2)).reshape(E, HD)
         for w in (wq_s, wk.astype(jnp.float32), wv.astype(jnp.float32))],
        axis=-1)                                              # (E, 3*H*D)

    # Pad N to a multiple of 256 lanes (full vregs; matches v6e/v7x MXU width).
    NP = ((3 * HD + 255) // 256) * 256
    w_qkv_p = jnp.zeros((E, NP), jnp.float32).at[:, :3 * HD].set(w_qkv)

    # Lane-dense output: pad W_o's output dim up to a multiple of 128 lanes so
    # the kernel's store is unmasked; the wrapper slices the real D cols back.
    DP = max(((D + 127) // 128) * 128, 128)
    wo_p = jnp.zeros((HD, DP), jnp.float32).at[:, :D].set(wo.astype(jnp.float32))
    return w_qkv_p, wo_p


@functools.partial(jax.jit, static_argnames=("H", "D"))
def multi_head_attention_packed(x, w_qkv_p, wo_p, *, H, D):
    """x:(S,E) with pre-packed weights -> (S,D)."""
    S, _ = x.shape
    DP = wo_p.shape[1]

    kernel = functools.partial(_mha_kernel, H=H, D=D)
    out_p = pl.pallas_call(
        kernel,
        out_shape=jax.ShapeDtypeStruct((S, DP), jnp.float32),
        # No grid: whole problem fits VMEM; explicit full-array VMEM residency.
        in_specs=[pl.BlockSpec(memory_space=pltpu.MemorySpace.VMEM)] * 3,
        out_specs=pl.BlockSpec(memory_space=pltpu.MemorySpace.VMEM),
        compiler_params=pltpu.CompilerParams(vmem_limit_bytes=32 * 1024 * 1024),
    )(x.astype(jnp.float32), w_qkv_p, wo_p)
    return out_p[:, :D]


def multi_head_attention(x, wq, wk, wv, wo):
    """Convenience wrapper: pack + call (packing should be hoisted in prod)."""
    H, _, D = wq.shape
    w_qkv_p, wo_p = pack_mha_weights(wq, wk, wv, wo)
    return multi_head_attention_packed(x, w_qkv_p, wo_p, H=H, D=D)


def _reference(x, wq, wk, wv, wo):
    """Pure-JAX mirror of the PyTorch forward (highest precision matmuls)."""
    H, E, D = wq.shape
    hp = jax.lax.Precision.HIGHEST
    heads = []
    for h in range(H):
        q = jnp.dot(x, wq[h], precision=hp)
        k = jnp.dot(x, wk[h], precision=hp)
        v = jnp.dot(x, wv[h], precision=hp)
        s = jnp.dot(q, k.T, precision=hp) / jnp.sqrt(jnp.float32(D))
        p = jax.nn.softmax(s, axis=-1)
        heads.append(jnp.dot(p, v, precision=hp))
    head_atts = jnp.concatenate(heads, axis=-1)               # (S, H*D)
    return jnp.dot(head_atts, wo, precision=hp)               # (S, D)


if __name__ == "__main__":
    # Small shapes implied by the module: seq=8 embeddings, embedding_length=32,
    # qkv_dim=16, head_num=4.
    S, E, D, H = 8, 32, 16, 4

    key = jax.random.PRNGKey(0)
    kx, kq, kk, kv, ko = jax.random.split(key, 5)

    x = jax.random.normal(kx, (S, E), dtype=jnp.float32)
    # Fan-in scaled weights so attention scores are O(1); with raw randn the
    # softmax degenerates into a numerically fragile argmax and any comparison
    # against a reference becomes precision roulette.
    wq = jax.random.normal(kq, (H, E, D), jnp.float32) / jnp.sqrt(jnp.float32(E))
    wk = jax.random.normal(kk, (H, E, D), jnp.float32) / jnp.sqrt(jnp.float32(E))
    wv = jax.random.normal(kv, (H, E, D), jnp.float32) / jnp.sqrt(jnp.float32(E))
    # W_o of shape (qkv_dim*head_num, qkv_dim), exactly as in the torch module.
    wo = jax.random.normal(ko, (H * D, D), jnp.float32) / jnp.sqrt(jnp.float32(H * D))

    # TODO(synk): ScaledDotProductAttention's source isn't provided; standard
    # softmax(QK^T / sqrt(d)) V semantics (no mask/dropout) are assumed.
    w_qkv_p, wo_p = pack_mha_weights(wq, wk, wv, wo)      # hoisted, runs once
    out = multi_head_attention_packed(x, w_qkv_p, wo_p, H=H, D=D)
    out = jax.block_until_ready(out)

    ref = _reference(x, wq, wk, wv, wo)
    assert out.shape == (S, D)
    assert jnp.allclose(out, ref, atol=2e-3, rtol=2e-3), "mismatch vs reference"

    print("KERNEL_OK")
</pallas_src>

<mosaic_0001>
module attributes {stable_mosaic.version = 11 : i64} {
  func.func @_mha_kernel(%arg0: memref<8x32xf32, #tpu.memory_space<vmem>>, %arg1: memref<32x256xf32, #tpu.memory_space<vmem>>, %arg2: memref<64x128xf32, #tpu.memory_space<vmem>>, %arg3: memref<8x128xf32, #tpu.memory_space<vmem>>) attributes {dimension_semantics = [], scalar_prefetch = 0 : i64, scratch_operands = 0 : i64, tpu.core_type = #tpu.core_type<tc>} {
    %c0 = arith.constant 0 : index
    %c0_0 = arith.constant 0 : index
    %0 = vector.load %arg0[%c0, %c0_0] : memref<8x32xf32, #tpu.memory_space<vmem>>, vector<8x32xf32>
    %c0_1 = arith.constant 0 : index
    %c0_2 = arith.constant 0 : index
    %1 = vector.load %arg1[%c0_1, %c0_2] : memref<32x256xf32, #tpu.memory_space<vmem>>, vector<32x256xf32>
    %cst = arith.constant dense<0.000000e+00> : vector<8x256xf32>
    %2 = tpu.matmul %0, %1, %cst {dimension_numbers = #tpu.dot_dimension_numbers<[1], [0], [0], [1], [0, 0, 1, 1], [], []>} : vector<8x32xf32>, vector<32x256xf32>, vector<8x256xf32> -> vector<8x256xf32>
    %cst_3 = arith.constant 0.000000e+00 : f32
    %3 = vector.broadcast %cst_3 : f32 to vector<8x128xf32>
    %4 = vector.extract_strided_slice %2 {offsets = [0, 0], sizes = [8, 16], strides = [1, 1]} : vector<8x256xf32> to vector<8x16xf32>
    %5 = vector.extract_strided_slice %2 {offsets = [0, 64], sizes = [8, 16], strides = [1, 1]} : vector<8x256xf32> to vector<8x16xf32>
    %6 = vector.extract_strided_slice %2 {offsets = [0, 128], sizes = [8, 16], strides = [1, 1]} : vector<8x256xf32> to vector<8x16xf32>
    %cst_4 = arith.constant dense<0.000000e+00> : vector<8x8xf32>
    %7 = tpu.matmul %4, %5, %cst_4 {dimension_numbers = #tpu.dot_dimension_numbers<[1], [1], [0], [0], [0, 0, 1, 0], [], []>} : vector<8x16xf32>, vector<8x16xf32>, vector<8x8xf32> -> vector<8x8xf32>
    %cst_5 = arith.constant dense<0xFF800000> : vector<8xf32>
    %8 = vector.multi_reduction <maximumf>, %7, %cst_5 [1] : vector<8x8xf32> to vector<8xf32>
    %9 = vector.shape_cast %8 : vector<8xf32> to vector<8x1xf32>
    %10 = vector.broadcast %9 : vector<8x1xf32> to vector<8x8xf32>
    %11 = arith.subf %7, %10 : vector<8x8xf32>
    %12 = math.exp %11 : vector<8x8xf32>
    %cst_6 = arith.constant dense<0.000000e+00> : vector<8xf32>
    %13 = vector.multi_reduction <add>, %12, %cst_6 [1] : vector<8x8xf32> to vector<8xf32>
    %14 = vector.shape_cast %13 : vector<8xf32> to vector<8x1xf32>
    %cst_7 = arith.constant dense<0.000000e+00> : vector<8x16xf32>
    %15 = tpu.matmul %12, %6, %cst_7 {dimension_numbers = #tpu.dot_dimension_numbers<[1], [0], [0], [1], [0, 0, 1, 1], [], []>} : vector<8x8xf32>, vector<8x16xf32>, vector<8x16xf32> -> vector<8x16xf32>
    %16 = tpu.reciprocal %14 : vector<8x1xf32> -> vector<8x1xf32>
    %17 = vector.broadcast %16 : vector<8x1xf32> to vector<8x16xf32>
    %18 = arith.mulf %15, %17 : vector<8x16xf32>
    %c0_8 = arith.constant 0 : index
    %c0_9 = arith.constant 0 : index
    %19 = vector.load %arg2[%c0_8, %c0_9] : memref<64x128xf32, #tpu.memory_space<vmem>>, vector<16x128xf32>
    %cst_10 = arith.constant dense<0.000000e+00> : vector<8x128xf32>
    %20 = tpu.matmul %18, %19, %cst_10 {dimension_numbers = #tpu.dot_dimension_numbers<[1], [0], [0], [1], [0, 0, 1, 1], [], []>} : vector<8x16xf32>, vector<16x128xf32>, vector<8x128xf32> -> vector<8x128xf32>
    %21 = arith.addf %3, %20 : vector<8x128xf32>
    %22 = vector.extract_strided_slice %2 {offsets = [0, 16], sizes = [8, 16], strides = [1, 1]} : vector<8x256xf32> to vector<8x16xf32>
    %23 = vector.extract_strided_slice %2 {offsets = [0, 80], sizes = [8, 16], strides = [1, 1]} : vector<8x256xf32> to vector<8x16xf32>
    %24 = vector.extract_strided_slice %2 {offsets = [0, 144], sizes = [8, 16], strides = [1, 1]} : vector<8x256xf32> to vector<8x16xf32>
    %cst_11 = arith.constant dense<0.000000e+00> : vector<8x8xf32>
    %25 = tpu.matmul %22, %23, %cst_11 {dimension_numbers = #tpu.dot_dimension_numbers<[1], [1], [0], [0], [0, 0, 1, 0], [], []>} : vector<8x16xf32>, vector<8x16xf32>, vector<8x8xf32> -> vector<8x8xf32>
    %cst_12 = arith.constant dense<0xFF800000> : vector<8xf32>
    %26 = vector.multi_reduction <maximumf>, %25, %cst_12 [1] : vector<8x8xf32> to vector<8xf32>
    %27 = vector.shape_cast %26 : vector<8xf32> to vector<8x1xf32>
    %28 = vector.broadcast %27 : vector<8x1xf32> to vector<8x8xf32>
    %29 = arith.subf %25, %28 : vector<8x8xf32>
    %30 = math.exp %29 : vector<8x8xf32>
    %cst_13 = arith.constant dense<0.000000e+00> : vector<8xf32>
    %31 = vector.multi_reduction <add>, %30, %cst_13 [1] : vector<8x8xf32> to vector<8xf32>
    %32 = vector.shape_cast %31 : vector<8xf32> to vector<8x1xf32>
    %cst_14 = arith.constant dense<0.000000e+00> : vector<8x16xf32>
    %33 = tpu.matmul %30, %24, %cst_14 {dimension_numbers = #tpu.dot_dimension_numbers<[1], [0], [0], [1], [0, 0, 1, 1], [], []>} : vector<8x8xf32>, vector<8x16xf32>, vector<8x16xf32> -> vector<8x16xf32>
    %34 = tpu.reciprocal %32 : vector<8x1xf32> -> vector<8x1xf32>
    %35 = vector.broadcast %34 : vector<8x1xf32> to vector<8x16xf32>
    %36 = arith.mulf %33, %35 : vector<8x16xf32>
    %c16 = arith.constant 16 : index
    %c0_15 = arith.constant 0 : index
    %37 = vector.load %arg2[%c16, %c0_15] : memref<64x128xf32, #tpu.memory_space<vmem>>, vector<16x128xf32>
    %cst_16 = arith.constant dense<0.000000e+00> : vector<8x128xf32>
    %38 = tpu.matmul %36, %37, %cst_16 {dimension_numbers = #tpu.dot_dimension_numbers<[1], [0], [0], [1], [0, 0, 1, 1], [], []>} : vector<8x16xf32>, vector<16x128xf32>, vector<8x128xf32> -> vector<8x128xf32>
    %39 = arith.addf %21, %38 : vector<8x128xf32>
    %40 = vector.extract_strided_slice %2 {offsets = [0, 32], sizes = [8, 16], strides = [1, 1]} : vector<8x256xf32> to vector<8x16xf32>
    %41 = vector.extract_strided_slice %2 {offsets = [0, 96], sizes = [8, 16], strides = [1, 1]} : vector<8x256xf32> to vector<8x16xf32>
    %42 = vector.extract_strided_slice %2 {offsets = [0, 160], sizes = [8, 16], strides = [1, 1]} : vector<8x256xf32> to vector<8x16xf32>
    %cst_17 = arith.constant dense<0.000000e+00> : vector<8x8xf32>
    %43 = tpu.matmul %40, %41, %cst_17 {dimension_numbers = #tpu.dot_dimension_numbers<[1], [1], [0], [0], [0, 0, 1, 0], [], []>} : vector<8x16xf32>, vector<8x16xf32>, vector<8x8xf32> -> vector<8x8xf32>
    %cst_18 = arith.constant dense<0xFF800000> : vector<8xf32>
    %44 = vector.multi_reduction <maximumf>, %43, %cst_18 [1] : vector<8x8xf32> to vector<8xf32>
    %45 = vector.shape_cast %44 : vector<8xf32> to vector<8x1xf32>
    %46 = vector.broadcast %45 : vector<8x1xf32> to vector<8x8xf32>
    %47 = arith.subf %43, %46 : vector<8x8xf32>
    %48 = math.exp %47 : vector<8x8xf32>
    %cst_19 = arith.constant dense<0.000000e+00> : vector<8xf32>
    %49 = vector.multi_reduction <add>, %48, %cst_19 [1] : vector<8x8xf32> to vector<8xf32>
    %50 = vector.shape_cast %49 : vector<8xf32> to vector<8x1xf32>
    %cst_20 = arith.constant dense<0.000000e+00> : vector<8x16xf32>
    %51 = tpu.matmul %48, %42, %cst_20 {dimension_numbers = #tpu.dot_dimension_numbers<[1], [0], [0], [1], [0, 0, 1, 1], [], []>} : vector<8x8xf32>, vector<8x16xf32>, vector<8x16xf32> -> vector<8x16xf32>
    %52 = tpu.reciprocal %50 : vector<8x1xf32> -> vector<8x1xf32>
    %53 = vector.broadcast %52 : vector<8x1xf32> to vector<8x16xf32>
    %54 = arith.mulf %51, %53 : vector<8x16xf32>
    %c32 = arith.constant 32 : index
    %c0_21 = arith.constant 0 : index
    %55 = vector.load %arg2[%c32, %c0_21] : memref<64x128xf32, #tpu.memory_space<vmem>>, vector<16x128xf32>
    %cst_22 = arith.constant dense<0.000000e+00> : vector<8x128xf32>
    %56 = tpu.matmul %54, %55, %cst_22 {dimension_numbers = #tpu.dot_dimension_numbers<[1], [0], [0], [1], [0, 0, 1, 1], [], []>} : vector<8x16xf32>, vector<16x128xf32>, vector<8x128xf32> -> vector<8x128xf32>
    %57 = arith.addf %39, %56 : vector<8x128xf32>
    %58 = vector.extract_strided_slice %2 {offsets = [0, 48], sizes = [8, 16], strides = [1, 1]} : vector<8x256xf32> to vector<8x16xf32>
    %59 = vector.extract_strided_slice %2 {offsets = [0, 112], sizes = [8, 16], strides = [1, 1]} : vector<8x256xf32> to vector<8x16xf32>
    %60 = vector.extract_strided_slice %2 {offsets = [0, 176], sizes = [8, 16], strides = [1, 1]} : vector<8x256xf32> to vector<8x16xf32>
    %cst_23 = arith.constant dense<0.000000e+00> : vector<8x8xf32>
    %61 = tpu.matmul %58, %59, %cst_23 {dimension_numbers = #tpu.dot_dimension_numbers<[1], [1], [0], [0], [0, 0, 1, 0], [], []>} : vector<8x16xf32>, vector<8x16xf32>, vector<8x8xf32> -> vector<8x8xf32>
    %cst_24 = arith.constant dense<0xFF800000> : vector<8xf32>
    %62 = vector.multi_reduction <maximumf>, %61, %cst_24 [1] : vector<8x8xf32> to vector<8xf32>
    %63 = vector.shape_cast %62 : vector<8xf32> to vector<8x1xf32>
    %64 = vector.broadcast %63 : vector<8x1xf32> to vector<8x8xf32>
    %65 = arith.subf %61, %64 : vector<8x8xf32>
    %66 = math.exp %65 : vector<8x8xf32>
    %cst_25 = arith.constant dense<0.000000e+00> : vector<8xf32>
    %67 = vector.multi_reduction <add>, %66, %cst_25 [1] : vector<8x8xf32> to vector<8xf32>
    %68 = vector.shape_cast %67 : vector<8xf32> to vector<8x1xf32>
    %cst_26 = arith.constant dense<0.000000e+00> : vector<8x16xf32>
    %69 = tpu.matmul %66, %60, %cst_26 {dimension_numbers = #tpu.dot_dimension_numbers<[1], [0], [0], [1], [0, 0, 1, 1], [], []>} : vector<8x8xf32>, vector<8x16xf32>, vector<8x16xf32> -> vector<8x16xf32>
    %70 = tpu.reciprocal %68 : vector<8x1xf32> -> vector<8x1xf32>
    %71 = vector.broadcast %70 : vector<8x1xf32> to vector<8x16xf32>
    %72 = arith.mulf %69, %71 : vector<8x16xf32>
    %c48 = arith.constant 48 : index
    %c0_27 = arith.constant 0 : index
    %73 = vector.load %arg2[%c48, %c0_27] : memref<64x128xf32, #tpu.memory_space<vmem>>, vector<16x128xf32>
    %cst_28 = arith.constant dense<0.000000e+00> : vector<8x128xf32>
    %74 = tpu.matmul %72, %73, %cst_28 {dimension_numbers = #tpu.dot_dimension_numbers<[1], [0], [0], [1], [0, 0, 1, 1], [], []>} : vector<8x16xf32>, vector<16x128xf32>, vector<8x128xf32> -> vector<8x128xf32>
    %75 = arith.addf %57, %74 : vector<8x128xf32>
    %c0_29 = arith.constant 0 : index
    %c0_30 = arith.constant 0 : index
    %76 = vector.load %arg3[%c0_29, %c0_30] : memref<8x128xf32, #tpu.memory_space<vmem>>, vector<8x128xf32>
    tpu.vector_store %arg3[%c0_29, %c0_30], %75 {strides = array<i32>} : memref<8x128xf32, #tpu.memory_space<vmem>>, vector<8x128xf32>,
    return
  }
}

</mosaic_0001>

<llo_original>
// kernel: multi_head_attention_packed.1
$region0: #{multi_head_attention_packed.1}
  #allocation0 [shape = 'u32[]', space=smem, size = 0x4, offset = 0x4, fixed_abs, tag = 'smem constant byte address 0x4 - core index']
  #allocation1 [shape = 'u32[72,128]{1,0:T(1,128)}', space=vmem, size = 0x9000, scoped, tag = 'internal scratch']
  %s0 = inlined_call_operand.hbm [shape: f32[8,32], index: 0, kind: input, shape index: {}]
  %s1 = inlined_call_operand.hbm [shape: f32[32,256], index: 1, kind: input, shape index: {}]
  %s2 = inlined_call_operand.hbm [shape: f32[64,128], index: 2, kind: input, shape index: {}]
  %s3 = inlined_call_operand.hbm [shape: f32[8,128], index: 3, kind: output, shape index: {}]
  %s4 = sld [smem:[#allocation0]]
  $region34: #{multi_head_attention_packed.1} parent=0
    _
  %s6 = ssub.s32 1, %s4
  %s7 = scalar_select 0, %s6, %s4
  $region1: #{multi_head_attention_packed.1} parent=0
    #allocation2 [shape = 'u8[4096]{0}', space=vmem, size = 0x1000, scoped, tag = 'input window, operand 0, single buffered']
    #allocation3 [shape = 's32[1]{0}', space=sflag, size = 0x4, scoped, tag = 'scoped memory for multi_head_attention_packed.1']
    #allocation4 [shape = 's32[1]{0}', space=sflag, size = 0x4, scoped, tag = 'scoped memory for multi_head_attention_packed.1']
    #allocation5 [shape = 'u8[32768]{0}', space=vmem, size = 0x8000, scoped, tag = 'input window, operand 1, single buffered']
    #allocation6 [shape = 's32[1]{0}', space=sflag, size = 0x4, scoped, tag = 'scoped memory for multi_head_attention_packed.1']
    #allocation7 [shape = 'u8[32768]{0}', space=vmem, size = 0x8000, scoped, tag = 'input window, operand 2, single buffered']
    #allocation8 [shape = 'u8[4096]{0}', space=vmem, size = 0x1000, scoped, tag = 'output window, operand 0, single buffered']
    %8 = vsyncpa [#allocation3], 0
    %9 = vsyncpa [#allocation6], 0
    %10 = vsyncpa [#allocation4], 0
    // Predicated region
    $region2: #{multi_head_attention_packed.1} parent=1 // pred_check
      _
    $region3: #{multi_head_attention_packed.1} parent=1 // pred_check_branch
      %12 = sbr.rel (0) target = $region5
    $region4: #{multi_head_attention_packed.1} parent=1 // pred_region
      %14 = vsyncadd [#allocation3], 0
      %s16 = sshll.u32 %s0, 4
      %s17 = int_to_ptr.hbm [resolvable:$true] %s16
      %s18 = sshll.u32 [#allocation2], 4
      %s19 = int_to_ptr.vmem [resolvable:$true] %s18
      %21 = dma.hbm_to_vmem [thread:$0]  %s17, 128, %s19, [#allocation3]
    $region5: #{multi_head_attention_packed.1} parent=1 // pred_fallthru
      _
    // Predicated region
    $region6: #{multi_head_attention_packed.1} parent=1 // pred_check
      _
    $region7: #{multi_head_attention_packed.1} parent=1 // pred_check_branch
      %23 = sbr.rel (0) target = $region9
    $region8: #{multi_head_attention_packed.1} parent=1 // pred_region
      %25 = vsyncadd [#allocation6], 0
      %s26 = sshll.u32 %s1, 4
      %s27 = int_to_ptr.hbm [resolvable:$true] %s26
      %s28 = sshll.u32 [#allocation5], 4
      %s29 = int_to_ptr.vmem [resolvable:$true] %s28
      %34 = dma.hbm_to_vmem [thread:$0]  %s27, 1024, %s29, [#allocation6], 256, 256, 16
    $region9: #{multi_head_attention_packed.1} parent=1 // pred_fallthru
      _
    // Predicated region
    $region10: #{multi_head_attention_packed.1} parent=1 // pred_check
      _
    $region11: #{multi_head_attention_packed.1} parent=1 // pred_check_branch
      %36 = sbr.rel (0) target = $region13
    $region12: #{multi_head_attention_packed.1} parent=1 // pred_region
      %38 = vsyncadd [#allocation6], 0
      %s39 = sshll.u32 %s2, 4
      %s40 = int_to_ptr.hbm [resolvable:$true] %s39
      %s41 = sshll.u32 [#allocation7], 4
      %s42 = int_to_ptr.vmem [resolvable:$true] %s41
      %47 = dma.hbm_to_vmem [thread:$0]  %s40, 1024, %s42, [#allocation6], 128, 128, 8
    $region13: #{multi_head_attention_packed.1} parent=1 // pred_fallthru
      _
    // Predicated region
    $region14: #{multi_head_attention_packed.1} parent=1 // pred_check
      _
    $region15: #{multi_head_attention_packed.1} parent=1 // pred_check_branch
      %49 = sbr.rel (0) target = $region17
    $region16: #{multi_head_attention_packed.1} parent=1 // pred_region
      %51 = dma.done [#allocation3], 128
    $region17: #{multi_head_attention_packed.1} parent=1 // pred_fallthru
      _
    // Predicated region
    $region18: #{multi_head_attention_packed.1} parent=1 // pred_check
      _
    $region19: #{multi_head_attention_packed.1} parent=1 // pred_check_branch
      %53 = sbr.rel (0) target = $region21
    $region20: #{multi_head_attention_packed.1} parent=1 // pred_region
      %55 = dma.done [#allocation6], 1024
    $region21: #{multi_head_attention_packed.1} parent=1 // pred_fallthru
      _
    // Predicated region
    $region22: #{multi_head_attention_packed.1} parent=1 // pred_check
      _
    $region23: #{multi_head_attention_packed.1} parent=1 // pred_check_branch
      %57 = sbr.rel (0) target = $region25
    $region24: #{multi_head_attention_packed.1} parent=1 // pred_region
      %59 = dma.done [#allocation6], 1024
    $region25: #{multi_head_attention_packed.1} parent=1 // pred_fallthru
      _
    %v60 = vld [vmem:[#allocation2] sm:$0xff]
    %v61 = vld [vmem:[#allocation5] sm:$0xff]
    %v62 = vld [vmem:[#allocation5 + $0x8] sm:$0xff]
    %v63 = vld [vmem:[#allocation5 + $0x10] sm:$0xff]
    %v64 = vld [vmem:[#allocation5 + $0x18] sm:$0xff]
    %v65 = vld [vmem:[#allocation5 + $0x20] sm:$0xff]
    %v66 = vld [vmem:[#allocation5 + $0x28] sm:$0xff]
    %v67 = vld [vmem:[#allocation5 + $0x30] sm:$0xff]
    %v68 = vld [vmem:[#allocation5 + $0x38] sm:$0xff]
    %vm69 = vcmask 261120
    %v71 = vsel %vm69, %v60, 0
    %73 = vmatpush.msra.mxu0 0.0
    %74 = vmatpush.msra.mxu0 0.0
    %75 = vmatpush.msra.mxu0 0.0
    %76 = vmatpush.msra.mxu0 0.0
    %77 = vmatpush.msra.mxu0 0.0
    %78 = vmatpush.msra.mxu0 0.0
    %79 = vmatpush.msra.mxu0 0.0
    %80 = vmatpush.msra.mxu0 0.0
    %81 = vmatpush.msra.mxu0 0.0
    %82 = vmatpush.msra.mxu0 0.0
    %83 = vmatpush.msra.mxu0 0.0
    %84 = vmatpush.msra.mxu0 0.0
    %85 = vmatpush.msra.mxu0 %v67
    %86 = vmatpush.msra.mxu0 %v65
    %87 = vmatpush.msra.mxu0 %v63
    %88 = vmatpush.msra.mxu0 %v61
    %89 = vmatmul.f32.gmra.mxu0 %v71
    %v90 = vpop.f32.mrf.mxu0
    %v91 = vadd.f32 0.0, %v90
    %92 = vdwg.mxu0
    %93 = vmatpush.msra.mxu0 0.0
    %94 = vmatpush.msra.mxu0 0.0
    %95 = vmatpush.msra.mxu0 0.0
    %96 = vmatpush.msra.mxu0 0.0
    %97 = vmatpush.msra.mxu0 0.0
    %98 = vmatpush.msra.mxu0 0.0
    %99 = vmatpush.msra.mxu0 0.0
    %100 = vmatpush.msra.mxu0 0.0
    %101 = vmatpush.msra.mxu0 0.0
    %102 = vmatpush.msra.mxu0 0.0
    %103 = vmatpush.msra.mxu0 0.0
    %104 = vmatpush.msra.mxu0 0.0
    %105 = vmatpush.msra.mxu0 %v68
    %106 = vmatpush.msra.mxu0 %v66
    %107 = vmatpush.msra.mxu0 %v64
    %108 = vmatpush.msra.mxu0 %v62
    %109 = vmatmul.f32.gmra.mxu0 %v71
    %v110 = vpop.f32.mrf.mxu0
    %v111 = vadd.f32 0.0, %v110
    %112 = vdwg.mxu0
    %114 = vrot.lane.b32.xlu0 %v91, 64
    %v115 = vpop.permute.xlu0 %114
    %vm116 = vcmask 130048
    %v117 = vsel %vm116, %v91, 0
    %v119 = vsel %vm116, %v115, 0
    %121 = vmatpush.xpose.msra.mxu0 0.0
    %122 = vmatpush.xpose.msra.mxu0 0.0
    %123 = vmatpush.xpose.msra.mxu0 0.0
    %124 = vmatpush.xpose.msra.mxu0 0.0
    %125 = vmatpush.xpose.msra.mxu0 0.0
    %126 = vmatpush.xpose.msra.mxu0 0.0
    %127 = vmatpush.xpose.msra.mxu0 0.0
    %128 = vmatpush.xpose.msra.mxu0 0.0
    %129 = vmatpush.xpose.msra.mxu0 0.0
    %130 = vmatpush.xpose.msra.mxu0 0.0
    %131 = vmatpush.xpose.msra.mxu0 0.0
    %132 = vmatpush.xpose.msra.mxu0 0.0
    %133 = vmatpush.xpose.msra.mxu0 0.0
    %134 = vmatpush.xpose.msra.mxu0 0.0
    %135 = vmatpush.xpose.msra.mxu0 0.0
    %136 = vmatpush.xpose.msra.mxu0 %v119
    %137 = vmatmul.f32.gmra.mxu0 %v117
    %v138 = vpop.f32.mrf.mxu0
    %v139 = vadd.f32 0.0, %v138
    %140 = vdwg.mxu0
    %vm141 = vcmask 64512
    %v142 = vsel %vm141, %v139, -inf
    %143 = vmax.xlane.f32.xlu0 %v142
    %v144 = vpop.xlane.xlu0 %143
    %v145 = vsub.f32 %v139, %v144
    %v146 = vmul.f32 %v145, 1.442695
    %v147 = vpow.pop %v146
    %v148 = vsel %vm141, %v147, 0.0
    %149 = vadd.xlane.f32.xlu0 %v148
    %v150 = vpop.xlane.xlu0 %149
    %v152 = vsel %vm141, %v147, 0
    %154 = vmatpush.msra.mxu0 0.0
    %155 = vmatpush.msra.mxu0 0.0
    %156 = vmatpush.msra.mxu0 0.0
    %157 = vmatpush.msra.mxu0 0.0
    %158 = vmatpush.msra.mxu0 0.0
    %159 = vmatpush.msra.mxu0 0.0
    %160 = vmatpush.msra.mxu0 0.0
    %161 = vmatpush.msra.mxu0 0.0
    %162 = vmatpush.msra.mxu0 0.0
    %163 = vmatpush.msra.mxu0 0.0
    %164 = vmatpush.msra.mxu0 0.0
    %165 = vmatpush.msra.mxu0 0.0
    %166 = vmatpush.msra.mxu0 0.0
    %167 = vmatpush.msra.mxu0 0.0
    %168 = vmatpush.msra.mxu0 0.0
    %169 = vmatpush.msra.mxu0 %v111
    %170 = vmatmul.f32.gmra.mxu0 %v152
    %v171 = vpop.f32.mrf.mxu0
    %v172 = vadd.f32 0.0, %v171
    %173 = vdwg.mxu0
    %v174 = vrcp.pop %v150
    %v175 = vmul.f32 %v150, %v174
    %v176 = vsub.f32 1.0, %v175
    %v177 = vmul.f32 %v174, %v176
    %v178 = vadd.f32 %v174, %v177
    %vm179 = vweird.f32 %v150
    %vm180 = vweird.f32 %v174
    %vm181 = vmor %vm179, %vm180
    %v182 = vsel %vm181, %v174, %v178
    %v183 = vand.u32 2147483647, %v150
    %vm184 = vcmp.eq.f32.partialorder %v183, 8.507059e+37
    %v185 = vand.u32 %v150, 2147483648
    %v186 = vor.u32 1.1754944e-38, %v185
    %v187 = vsel %vm184, %v186, %v182
    %v188 = vmul.f32 %v172, %v187
    %v189 = vld [vmem:[#allocation7] sm:$0xff]
    %v190 = vld [vmem:[#allocation7 + $0x8] sm:$0xff]
    %191 = vrot.lane.b32.xlu0 %v91, 112
    %v192 = vpop.permute.xlu0 %191
    %193 = vrot.lane.b32.xlu0 %v91, 48
    %v194 = vpop.permute.xlu0 %193
    %v195 = vsel %vm116, %v192, 0
    %v197 = vsel %vm116, %v194, 0
    %199 = vmatpush.xpose.msra.mxu0 0.0
    %200 = vmatpush.xpose.msra.mxu0 0.0
    %201 = vmatpush.xpose.msra.mxu0 0.0
    %202 = vmatpush.xpose.msra.mxu0 0.0
    %203 = vmatpush.xpose.msra.mxu0 0.0
    %204 = vmatpush.xpose.msra.mxu0 0.0
    %205 = vmatpush.xpose.msra.mxu0 0.0
    %206 = vmatpush.xpose.msra.mxu0 0.0
    %207 = vmatpush.xpose.msra.mxu0 0.0
    %208 = vmatpush.xpose.msra.mxu0 0.0
    %209 = vmatpush.xpose.msra.mxu0 0.0
    %210 = vmatpush.xpose.msra.mxu0 0.0
    %211 = vmatpush.xpose.msra.mxu0 0.0
    %212 = vmatpush.xpose.msra.mxu0 0.0
    %213 = vmatpush.xpose.msra.mxu0 0.0
    %214 = vmatpush.xpose.msra.mxu0 %v197
    %215 = vmatmul.f32.gmra.mxu0 %v195
    %v216 = vpop.f32.mrf.mxu0
    %v217 = vadd.f32 0.0, %v216
    %218 = vdwg.mxu0
    %v219 = vsel %vm141, %v217, -inf
    %220 = vmax.xlane.f32.xlu0 %v219
    %v221 = vpop.xlane.xlu0 %220
    %v222 = vsub.f32 %v217, %v221
    %v223 = vmul.f32 %v222, 1.442695
    %v224 = vpow.pop %v223
    %v225 = vsel %vm141, %v224, 0.0
    %226 = vadd.xlane.f32.xlu0 %v225
    %v227 = vpop.xlane.xlu0 %226
    %229 = vrot.lane.b32.xlu0 %v111, 112
    %v230 = vpop.permute.xlu0 %229
    %v233 = vsel %vm141, %v224, 0
    %235 = vmatpush.msra.mxu0 0.0
    %236 = vmatpush.msra.mxu0 0.0
    %237 = vmatpush.msra.mxu0 0.0
    %238 = vmatpush.msra.mxu0 0.0
    %239 = vmatpush.msra.mxu0 0.0
    %240 = vmatpush.msra.mxu0 0.0
    %241 = vmatpush.msra.mxu0 0.0
    %242 = vmatpush.msra.mxu0 0.0
    %243 = vmatpush.msra.mxu0 0.0
    %244 = vmatpush.msra.mxu0 0.0
    %245 = vmatpush.msra.mxu0 0.0
    %246 = vmatpush.msra.mxu0 0.0
    %247 = vmatpush.msra.mxu0 0.0
    %248 = vmatpush.msra.mxu0 0.0
    %249 = vmatpush.msra.mxu0 0.0
    %250 = vmatpush.msra.mxu0 %v230
    %251 = vmatmul.f32.gmra.mxu0 %v233
    %v252 = vpop.f32.mrf.mxu0
    %v253 = vadd.f32 0.0, %v252
    %254 = vdwg.mxu0
    %v255 = vrcp.pop %v227
    %v256 = vmul.f32 %v227, %v255
    %v257 = vsub.f32 1.0, %v256
    %v258 = vmul.f32 %v255, %v257
    %v259 = vadd.f32 %v255, %v258
    %vm260 = vweird.f32 %v227
    %vm261 = vweird.f32 %v255
    %vm262 = vmor %vm260, %vm261
    %v263 = vsel %vm262, %v255, %v259
    %v264 = vand.u32 2147483647, %v227
    %vm265 = vcmp.eq.f32.partialorder %v264, 8.507059e+37
    %v266 = vand.u32 %v227, 2147483648
    %v267 = vor.u32 1.1754944e-38, %v266
    %v268 = vsel %vm265, %v267, %v263
    %v269 = vmul.f32 %v253, %v268
    %v270 = vld [vmem:[#allocation7 + $0x10] sm:$0xff]
    %v271 = vld [vmem:[#allocation7 + $0x18] sm:$0xff]
    %v273 = vsel %vm116, %v269, 0
    %275 = vmatpush.msra.mxu0 0.0
    %276 = vmatpush.msra.mxu0 0.0
    %277 = vmatpush.msra.mxu0 0.0
    %278 = vmatpush.msra.mxu0 0.0
    %279 = vmatpush.msra.mxu0 0.0
    %280 = vmatpush.msra.mxu0 0.0
    %281 = vmatpush.msra.mxu0 0.0
    %282 = vmatpush.msra.mxu0 0.0
    %283 = vmatpush.msra.mxu0 0.0
    %284 = vmatpush.msra.mxu0 0.0
    %285 = vmatpush.msra.mxu0 0.0
    %286 = vmatpush.msra.mxu0 0.0
    %287 = vmatpush.msra.mxu0 0.0
    %288 = vmatpush.msra.mxu0 0.0
    %289 = vmatpush.msra.mxu0 %v271
    %290 = vmatpush.msra.mxu0 %v270
    %291 = vmatmul.f32.gmra.mxu0 %v273
    %v292 = vpop.f32.mrf.mxu0
    %v293 = vadd.f32 0.0, %v292
    %294 = vdwg.mxu0
    %v296 = vsel %vm116, %v188, 0
    %298 = vmatpush.msra.mxu0 0.0
    %299 = vmatpush.msra.mxu0 0.0
    %300 = vmatpush.msra.mxu0 0.0
    %301 = vmatpush.msra.mxu0 0.0
    %302 = vmatpush.msra.mxu0 0.0
    %303 = vmatpush.msra.mxu0 0.0
    %304 = vmatpush.msra.mxu0 0.0
    %305 = vmatpush.msra.mxu0 0.0
    %306 = vmatpush.msra.mxu0 0.0
    %307 = vmatpush.msra.mxu0 0.0
    %308 = vmatpush.msra.mxu0 0.0
    %309 = vmatpush.msra.mxu0 0.0
    %310 = vmatpush.msra.mxu0 0.0
    %311 = vmatpush.msra.mxu0 0.0
    %312 = vmatpush.msra.mxu0 %v190
    %313 = vmatpush.msra.mxu0 %v189
    %314 = vmatmul.f32.gmra.mxu0 %v296
    %v315 = vpop.f32.mrf.mxu0
    %v316 = vadd.f32 %v293, %v315
    %317 = vdwg.mxu0
    %318 = vrot.lane.b32.xlu0 %v91, 96
    %v319 = vpop.permute.xlu0 %318
    %320 = vrot.lane.b32.xlu0 %v91, 32
    %v321 = vpop.permute.xlu0 %320
    %v322 = vsel %vm116, %v319, 0
    %v324 = vsel %vm116, %v321, 0
    %326 = vmatpush.xpose.msra.mxu0 0.0
    %327 = vmatpush.xpose.msra.mxu0 0.0
    %328 = vmatpush.xpose.msra.mxu0 0.0
    %329 = vmatpush.xpose.msra.mxu0 0.0
    %330 = vmatpush.xpose.msra.mxu0 0.0
    %331 = vmatpush.xpose.msra.mxu0 0.0
    %332 = vmatpush.xpose.msra.mxu0 0.0
    %333 = vmatpush.xpose.msra.mxu0 0.0
    %334 = vmatpush.xpose.msra.mxu0 0.0
    %335 = vmatpush.xpose.msra.mxu0 0.0
    %336 = vmatpush.xpose.msra.mxu0 0.0
    %337 = vmatpush.xpose.msra.mxu0 0.0
    %338 = vmatpush.xpose.msra.mxu0 0.0
    %339 = vmatpush.xpose.msra.mxu0 0.0
    %340 = vmatpush.xpose.msra.mxu0 0.0
    %341 = vmatpush.xpose.msra.mxu0 %v324
    %342 = vmatmul.f32.gmra.mxu0 %v322
    %v343 = vpop.f32.mrf.mxu0
    %v344 = vadd.f32 0.0, %v343
    %345 = vdwg.mxu0
    %v346 = vsel %vm141, %v344, -inf
    %347 = vmax.xlane.f32.xlu0 %v346
    %v348 = vpop.xlane.xlu0 %347
    %v349 = vsub.f32 %v344, %v348
    %v350 = vmul.f32 %v349, 1.442695
    %v351 = vpow.pop %v350
    %v352 = vsel %vm141, %v351, 0.0
    %353 = vadd.xlane.f32.xlu0 %v352
    %v354 = vpop.xlane.xlu0 %353
    %355 = vrot.lane.b32.xlu0 %v111, 96
    %v356 = vpop.permute.xlu0 %355
    %v359 = vsel %vm141, %v351, 0
    %361 = vmatpush.msra.mxu0 0.0
    %362 = vmatpush.msra.mxu0 0.0
    %363 = vmatpush.msra.mxu0 0.0
    %364 = vmatpush.msra.mxu0 0.0
    %365 = vmatpush.msra.mxu0 0.0
    %366 = vmatpush.msra.mxu0 0.0
    %367 = vmatpush.msra.mxu0 0.0
    %368 = vmatpush.msra.mxu0 0.0
    %369 = vmatpush.msra.mxu0 0.0
    %370 = vmatpush.msra.mxu0 0.0
    %371 = vmatpush.msra.mxu0 0.0
    %372 = vmatpush.msra.mxu0 0.0
    %373 = vmatpush.msra.mxu0 0.0
    %374 = vmatpush.msra.mxu0 0.0
    %375 = vmatpush.msra.mxu0 0.0
    %376 = vmatpush.msra.mxu0 %v356
    %377 = vmatmul.f32.gmra.mxu0 %v359
    %v378 = vpop.f32.mrf.mxu0
    %v379 = vadd.f32 0.0, %v378
    %380 = vdwg.mxu0
    %v381 = vrcp.pop %v354
    %v382 = vmul.f32 %v354, %v381
    %v383 = vsub.f32 1.0, %v382
    %v384 = vmul.f32 %v381, %v383
    %v385 = vadd.f32 %v381, %v384
    %vm386 = vweird.f32 %v354
    %vm387 = vweird.f32 %v381
    %vm388 = vmor %vm386, %vm387
    %v389 = vsel %vm388, %v381, %v385
    %v390 = vand.u32 2147483647, %v354
    %vm391 = vcmp.eq.f32.partialorder %v390, 8.507059e+37
    %v392 = vand.u32 %v354, 2147483648
    %v393 = vor.u32 1.1754944e-38, %v392
    %v394 = vsel %vm391, %v393, %v389
    %v395 = vmul.f32 %v379, %v394
    %v396 = vld [vmem:[#allocation7 + $0x20] sm:$0xff]
    %v397 = vld [vmem:[#allocation7 + $0x28] sm:$0xff]
    %v399 = vsel %vm116, %v395, 0
    %401 = vmatpush.msra.mxu0 0.0
    %402 = vmatpush.msra.mxu0 0.0
    %403 = vmatpush.msra.mxu0 0.0
    %404 = vmatpush.msra.mxu0 0.0
    %405 = vmatpush.msra.mxu0 0.0
    %406 = vmatpush.msra.mxu0 0.0
    %407 = vmatpush.msra.mxu0 0.0
    %408 = vmatpush.msra.mxu0 0.0
    %409 = vmatpush.msra.mxu0 0.0
    %410 = vmatpush.msra.mxu0 0.0
    %411 = vmatpush.msra.mxu0 0.0
    %412 = vmatpush.msra.mxu0 0.0
    %413 = vmatpush.msra.mxu0 0.0
    %414 = vmatpush.msra.mxu0 0.0
    %415 = vmatpush.msra.mxu0 %v397
    %416 = vmatpush.msra.mxu0 %v396
    %417 = vmatmul.f32.gmra.mxu0 %v399
    %v418 = vpop.f32.mrf.mxu0
    %v419 = vadd.f32 0.0, %v418
    %420 = vdwg.mxu0
    %v421 = vadd.f32 %v316, %v419
    %422 = vrot.lane.b32.xlu0 %v91, 80
    %v423 = vpop.permute.xlu0 %422
    %424 = vrot.lane.b32.xlu0 %v91, 16
    %v425 = vpop.permute.xlu0 %424
    %v426 = vsel %vm116, %v423, 0
    %v428 = vsel %vm116, %v425, 0
    %430 = vmatpush.xpose.msra.mxu0 0.0
    %431 = vmatpush.xpose.msra.mxu0 0.0
    %432 = vmatpush.xpose.msra.mxu0 0.0
    %433 = vmatpush.xpose.msra.mxu0 0.0
    %434 = vmatpush.xpose.msra.mxu0 0.0
    %435 = vmatpush.xpose.msra.mxu0 0.0
    %436 = vmatpush.xpose.msra.mxu0 0.0
    %437 = vmatpush.xpose.msra.mxu0 0.0
    %438 = vmatpush.xpose.msra.mxu0 0.0
    %439 = vmatpush.xpose.msra.mxu0 0.0
    %440 = vmatpush.xpose.msra.mxu0 0.0
    %441 = vmatpush.xpose.msra.mxu0 0.0
    %442 = vmatpush.xpose.msra.mxu0 0.0
    %443 = vmatpush.xpose.msra.mxu0 0.0
    %444 = vmatpush.xpose.msra.mxu0 0.0
    %445 = vmatpush.xpose.msra.mxu0 %v428
    %446 = vmatmul.f32.gmra.mxu0 %v426
    %v447 = vpop.f32.mrf.mxu0
    %v448 = vadd.f32 0.0, %v447
    %449 = vdwg.mxu0
    %v450 = vsel %vm141, %v448, -inf
    %451 = vmax.xlane.f32.xlu0 %v450
    %v452 = vpop.xlane.xlu0 %451
    %v453 = vsub.f32 %v448, %v452
    %v454 = vmul.f32 %v453, 1.442695
    %v455 = vpow.pop %v454
    %v456 = vsel %vm141, %v455, 0.0
    %457 = vadd.xlane.f32.xlu0 %v456
    %v458 = vpop.xlane.xlu0 %457
    %459 = vrot.lane.b32.xlu0 %v111, 80
    %v460 = vpop.permute.xlu0 %459
    %v463 = vsel %vm141, %v455, 0
    %465 = vmatpush.msra.mxu0 0.0
    %466 = vmatpush.msra.mxu0 0.0
    %467 = vmatpush.msra.mxu0 0.0
    %468 = vmatpush.msra.mxu0 0.0
    %469 = vmatpush.msra.mxu0 0.0
    %470 = vmatpush.msra.mxu0 0.0
    %471 = vmatpush.msra.mxu0 0.0
    %472 = vmatpush.msra.mxu0 0.0
    %473 = vmatpush.msra.mxu0 0.0
    %474 = vmatpush.msra.mxu0 0.0
    %475 = vmatpush.msra.mxu0 0.0
    %476 = vmatpush.msra.mxu0 0.0
    %477 = vmatpush.msra.mxu0 0.0
    %478 = vmatpush.msra.mxu0 0.0
    %479 = vmatpush.msra.mxu0 0.0
    %480 = vmatpush.msra.mxu0 %v460
    %481 = vmatmul.f32.gmra.mxu0 %v463
    %v482 = vpop.f32.mrf.mxu0
    %v483 = vadd.f32 0.0, %v482
    %484 = vdwg.mxu0
    %v485 = vrcp.pop %v458
    %v486 = vmul.f32 %v458, %v485
    %v487 = vsub.f32 1.0, %v486
    %v488 = vmul.f32 %v485, %v487
    %v489 = vadd.f32 %v485, %v488
    %vm490 = vweird.f32 %v458
    %vm491 = vweird.f32 %v485
    %vm492 = vmor %vm490, %vm491
    %v493 = vsel %vm492, %v485, %v489
    %v494 = vand.u32 2147483647, %v458
    %vm495 = vcmp.eq.f32.partialorder %v494, 8.507059e+37
    %v496 = vand.u32 %v458, 2147483648
    %v497 = vor.u32 1.1754944e-38, %v496
    %v498 = vsel %vm495, %v497, %v493
    %v499 = vmul.f32 %v483, %v498
    %v500 = vld [vmem:[#allocation7 + $0x30] sm:$0xff]
    %v501 = vld [vmem:[#allocation7 + $0x38] sm:$0xff]
    %v503 = vsel %vm116, %v499, 0
    %505 = vmatpush.msra.mxu0 0.0
    %506 = vmatpush.msra.mxu0 0.0
    %507 = vmatpush.msra.mxu0 0.0
    %508 = vmatpush.msra.mxu0 0.0
    %509 = vmatpush.msra.mxu0 0.0
    %510 = vmatpush.msra.mxu0 0.0
    %511 = vmatpush.msra.mxu0 0.0
    %512 = vmatpush.msra.mxu0 0.0
    %513 = vmatpush.msra.mxu0 0.0
    %514 = vmatpush.msra.mxu0 0.0
    %515 = vmatpush.msra.mxu0 0.0
    %516 = vmatpush.msra.mxu0 0.0
    %517 = vmatpush.msra.mxu0 0.0
    %518 = vmatpush.msra.mxu0 0.0
    %519 = vmatpush.msra.mxu0 %v501
    %520 = vmatpush.msra.mxu0 %v500
    %521 = vmatmul.f32.gmra.mxu0 %v503
    %v522 = vpop.f32.mrf.mxu0
    %v523 = vadd.f32 0.0, %v522
    %524 = vdwg.mxu0
    %v525 = vadd.f32 %v421, %v523
    %526 = vst [vmem:[#allocation8] sm:$0xff] %v525
    // Predicated region
    $region26: #{multi_head_attention_packed.1} parent=1 // pred_check
      _
    $region27: #{multi_head_attention_packed.1} parent=1 // pred_check_branch
      %528 = sbr.rel (0) target = $region29
    $region28: #{multi_head_attention_packed.1} parent=1 // pred_region
      %530 = vsyncadd [#allocation4], 0
      %s532 = sshll.u32 [#allocation8], 4
      %s533 = int_to_ptr.vmem [resolvable:$true] %s532
      %s534 = sshll.u32 %s3, 4
      %s535 = int_to_ptr.hbm [resolvable:$true] %s534
      %537 = dma.vmem_to_hbm [thread:$0]  %s533, 128, %s535, [#allocation4]
    $region29: #{multi_head_attention_packed.1} parent=1 // pred_fallthru
      _
    // Predicated region
    $region30: #{multi_head_attention_packed.1} parent=1 // pred_check
      _
    $region31: #{multi_head_attention_packed.1} parent=1 // pred_check_branch
      %539 = sbr.rel (0) target = $region33
    $region32: #{multi_head_attention_packed.1} parent=1 // pred_region
      %541 = dma.done [#allocation4], 128
    $region33: #{multi_head_attention_packed.1} parent=1 // pred_fallthru
      _
    %542 = vsyncpa [#allocation3], 1
    %543 = vsyncpa [#allocation6], 1
    %544 = vsyncpa [#allocation4], 1

</llo_original>
